<compile_context>
chip_gen: v7x
topology: tpu7x:2x2x1
jax: 0.10.0
libtpu: 0.0.40
codegen_flags: <defaults>
</compile_context>

<pallas_src>
import functools

import jax
import jax.numpy as jnp
from jax.experimental import pallas as pl
from jax.experimental.pallas import tpu as pltpu


def _round_up(x, m):
    return ((x + m - 1) // m) * m


def _vmem_capacity_bytes():
    """Physical VMEM per core; falls back to the smallest (v7x, 64 MiB)."""
    try:
        return int(pltpu.get_tpu_info().vmem_capacity_bytes)
    except Exception:
        return 64 << 20


# ---------------------------------------------------------------------------
# Kernel
# ---------------------------------------------------------------------------
def _highway_fused_kernel(x_ref, w_ref, b_ref, o_ref):
    """Fused highway stack on one (tm, Dp) row tile.

    Grid = (row_tiles, layers); layer axis innermost ("arbitrary").

    x_ref : (tm, Dp)  f32   input rows tile (DMA'd once per row tile)
    w_ref : (L, Dp, 2Dp) bf16  ALL layer weights [W_lin^T | W_gate^T], VMEM-resident
    b_ref : (L, 1, 2Dp)  f32   ALL layer biases  [b_lin   | b_gate  ], VMEM-resident
    o_ref : (tm, Dp)  f32   output tile; also the carried activation across layers
                            (layer-invariant index -> resident, written to HBM once)
    """
    l = pl.program_id(1)
    n_layers = pl.num_programs(1)
    dp = x_ref.shape[1]

    @pl.when(l == 0)
    def _():
        o_ref[...] = x_ref[...].astype(o_ref.dtype)

    x = o_ref[...]                                   # f32 carried activation

    # One wide bf16 MXU matmul: (tm, Dp) @ (Dp, 2Dp) -> (tm, 2Dp), f32 accumulate.
    pre = jnp.dot(x.astype(jnp.bfloat16), w_ref[l],
                  preferred_element_type=jnp.float32) + b_ref[l]
    lin_pre = pre[:, :dp]
    gate_pre = pre[:, dp:]

    # sigmoid via EUP exp + EUP approximate reciprocal (keeps the VALU slot free)
    gate = pl.reciprocal(1.0 + jnp.exp(-gate_pre), approx=True)
    nonlinear = jnp.maximum(lin_pre, 0.0)

    # gate*nl + (1-gate)*x  ==  x + gate*(nl - x)   (one fewer VPU multiply)
    o_ref[...] = x + gate * (nonlinear - x)

    # (n_layers used only for clarity of the phase structure)
    del n_layers


# ---------------------------------------------------------------------------
# pallas_call wrapper
# ---------------------------------------------------------------------------
def _highway_fused_call(x_pad, wcat, bcat, *, tm):
    """x_pad: (Mp, Dp) f32; wcat: (L, Dp, 2Dp) bf16; bcat: (L, 1, 2Dp) f32."""
    mp, dp = x_pad.shape
    n_layers = wcat.shape[0]
    grid = (mp // tm, n_layers)

    # VMEM budget: double-buffered x/out tiles, resident (double-buffered once)
    # weights/biases, plus the (tm, 2Dp) matmul result and gate/nonlinear temps.
    tile_b = tm * dp * 4
    w_b = n_layers * dp * 2 * dp * 2      # bf16
    b_b = n_layers * 2 * dp * 4
    tmp_b = 3 * tm * 2 * dp * 4           # pre, gate, nonlinear
    need = 2 * tile_b + 2 * tile_b + 2 * (w_b + b_b) + tmp_b

    cap = _vmem_capacity_bytes()
    vmem_limit = int(min(need + (8 << 20), cap - (8 << 20), 100 << 20))
    vmem_limit = max(vmem_limit, 32 << 20)

    return pl.pallas_call(
        _highway_fused_kernel,
        out_shape=jax.ShapeDtypeStruct((mp, dp), jnp.float32),
        grid_spec=pltpu.PrefetchScalarGridSpec(
            num_scalar_prefetch=0,
            grid=grid,
            in_specs=[
                # x tile: index independent of layer axis -> fetched once per row tile
                pl.BlockSpec((tm, dp), lambda i, l: (i, 0)),
                # ALL layer weights, constant index -> DMA'd once, VMEM-resident
                pl.BlockSpec((n_layers, dp, 2 * dp), lambda i, l: (0, 0, 0)),
                # ALL layer biases, constant index -> DMA'd once, VMEM-resident
                pl.BlockSpec((n_layers, 1, 2 * dp), lambda i, l: (0, 0, 0)),
            ],
            # output index independent of layer axis -> carried in VMEM, one HBM write
            out_specs=pl.BlockSpec((tm, dp), lambda i, l: (i, 0)),
        ),
        compiler_params=pltpu.CompilerParams(
            dimension_semantics=("parallel", "arbitrary"),
            vmem_limit_bytes=vmem_limit,
        ),
    )(x_pad, wcat, bcat)


# ---------------------------------------------------------------------------
# Parameter packing (host-side, done ONCE per parameter set — not per forward)
# ---------------------------------------------------------------------------
def prepare_highway_params(params, dim_pad=None):
    """Pack per-layer (Wl, bl, Wg, bg) into wcat (L, Dp, 2Dp) bf16 / bcat (L, 1, 2Dp) f32.

    Columns [0:Dp] = linear branch, [Dp:2Dp] = gate branch.  Padded rows/cols are
    zero, so padded activation columns stay exactly zero through the highway
    combine (relu(0)=0, sigmoid(0)=0.5, 0 + 0.5*(0-0) = 0).
    """
    dim = params[0][0].shape[0]
    if dim_pad is None:
        dim_pad = _round_up(dim, 128)
    pad = dim_pad - dim

    w_lin = jnp.stack([p[0] for p in params]).astype(jnp.float32)    # (L, dim, dim)
    b_lin = jnp.stack([p[1] for p in params]).astype(jnp.float32)    # (L, dim)
    w_gate = jnp.stack([p[2] for p in params]).astype(jnp.float32)
    b_gate = jnp.stack([p[3] for p in params]).astype(jnp.float32)

    # x @ W^T  -> store W^T, pad to (L, Dp, Dp), concat the two branches on cols.
    wl = jnp.pad(jnp.swapaxes(w_lin, 1, 2), ((0, 0), (0, pad), (0, pad)))
    wg = jnp.pad(jnp.swapaxes(w_gate, 1, 2), ((0, 0), (0, pad), (0, pad)))
    wcat = jnp.concatenate([wl, wg], axis=2).astype(jnp.bfloat16)     # (L, Dp, 2Dp)

    bl = jnp.pad(b_lin, ((0, 0), (0, pad)))
    bg = jnp.pad(b_gate, ((0, 0), (0, pad)))
    bcat = jnp.concatenate([bl, bg], axis=1)[:, None, :].astype(jnp.float32)

    return wcat, bcat


# ---------------------------------------------------------------------------
# Forward wrapper
# ---------------------------------------------------------------------------
def _choose_tm(rows, tm):
    """Row-tile size: multiple of 8, limit pad waste, prefer >=2 tiles when possible."""
    tm_eff = min(tm, _round_up(rows, 8))
    if tm_eff < rows < 2 * tm_eff:
        # rows just above one tile would pad ~2x; split into two balanced tiles
        tm_eff = _round_up((rows + 1) // 2, 8)
    return tm_eff


@functools.partial(jax.jit, static_argnames=("dim", "tm"))
def highway_forward(x, wcat, bcat, *, dim, tm=256):
    """Highway forward. x: (..., dim); wcat/bcat from prepare_highway_params."""
    orig_shape = x.shape
    x2 = x.reshape(-1, dim).astype(jnp.float32)
    rows = x2.shape[0]
    dim_pad = wcat.shape[1]

    tm_eff = _choose_tm(rows, tm)
    rows_pad = _round_up(rows, tm_eff)

    x_pad = jnp.pad(x2, ((0, rows_pad - rows), (0, dim_pad - dim)))
    out = _highway_fused_call(x_pad, wcat, bcat, tm=tm_eff)
    return out[:rows, :dim].reshape(orig_shape).astype(x.dtype)


# ---------------------------------------------------------------------------
# Init + pure-JAX reference
# ---------------------------------------------------------------------------
def init_highway_params(key, layer_num, dim):
    """Deterministic init mimicking nn.Linear default (uniform +/- 1/sqrt(dim))."""
    params = []
    bound = 1.0 / jnp.sqrt(dim)
    for i in range(layer_num):
        k = jax.random.fold_in(key, i)
        k1, k2, k3, k4 = jax.random.split(k, 4)
        w_lin = jax.random.uniform(k1, (dim, dim), jnp.float32, -bound, bound)
        b_lin = jax.random.uniform(k2, (dim,), jnp.float32, -bound, bound)
        w_gate = jax.random.uniform(k3, (dim, dim), jnp.float32, -bound, bound)
        b_gate = jax.random.uniform(k4, (dim,), jnp.float32, -bound, bound)
        params.append((w_lin, b_lin, w_gate, b_gate))
    return params


def highway_reference(x, params):
    """Pure-JAX f32 reference for correctness check."""
    orig_shape = x.shape
    x2 = x.reshape(-1, orig_shape[-1]).astype(jnp.float32)
    for (w_lin, b_lin, w_gate, b_gate) in params:
        gate = jax.nn.sigmoid(x2 @ w_gate.T + b_gate)
        nonlinear = jnp.maximum(x2 @ w_lin.T + b_lin, 0.0)
        x2 = gate * nonlinear + (1.0 - gate) * x2
    return x2.reshape(orig_shape).astype(x.dtype)


if __name__ == "__main__":
    layer_num = 3
    dim = 200          # not lane-aligned on purpose: exercises the pad-to-256 path
    batch, seq = 2, 8  # leading dims; flattened to 16 rows inside the wrapper

    key = jax.random.PRNGKey(0)
    kx, kp = jax.random.split(key)
    x = jax.random.normal(kx, (batch, seq, dim), dtype=jnp.float32)
    params = init_highway_params(kp, layer_num, dim)

    # Pack parameters ONCE (outside the hot path), then run the fused kernel.
    wcat, bcat = prepare_highway_params(params)
    out = highway_forward(x, wcat, bcat, dim=dim)
    out = jax.block_until_ready(out)

    ref = highway_reference(x, params)
    assert out.shape == x.shape
    # bf16 MXU matmul + approx reciprocal over 3 layers -> loosened tolerance vs f32 ref
    max_err = float(jnp.max(jnp.abs(out - ref)))
    assert jnp.allclose(out, ref, atol=5e-2, rtol=5e-2), f"mismatch vs reference (max abs err {max_err})"

    print("KERNEL_OK")
</pallas_src>

<mosaic_0001>
module attributes {stable_mosaic.version = 11 : i64} {
  func.func @_highway_fused_kernel(%arg0: i32, %arg1: i32, %arg2: memref<16x256xf32, #tpu.memory_space<vmem>>, %arg3: memref<3x256x512xbf16, #tpu.memory_space<vmem>>, %arg4: memref<3x1x512xf32, #tpu.memory_space<vmem>>, %arg5: memref<16x256xf32, #tpu.memory_space<vmem>>) attributes {dimension_semantics = [#tpu.dimension_semantics<parallel>, #tpu.dimension_semantics<arbitrary>], iteration_bounds = array<i64: 1, 3>, scalar_prefetch = 0 : i64, scratch_operands = 0 : i64, tpu.core_type = #tpu.core_type<tc>, window_params = [{transform_indices = @transform_0, window_bounds = array<i64: 16, 256>}, {pipeline_mode = #tpu.pipeline_mode<synchronous>, transform_indices = @transform_1, window_bounds = array<i64: 3, 256, 512>}, {pipeline_mode = #tpu.pipeline_mode<synchronous>, transform_indices = @transform_2, window_bounds = array<i64: 3, 1, 512>}, {transform_indices = @transform_3, window_bounds = array<i64: 16, 256>}]} {
    %c0_i32 = arith.constant 0 : i32
    %0 = arith.cmpi eq, %arg1, %c0_i32 : i32
    %1 = arith.extui %0 : i1 to i32
    %c0_i32_0 = arith.constant 0 : i32
    %2 = arith.cmpi ne, %1, %c0_i32_0 : i32
    scf.if %2 {
      %c0_11 = arith.constant 0 : index
      %c0_12 = arith.constant 0 : index
      %28 = vector.load %arg2[%c0_11, %c0_12] : memref<16x256xf32, #tpu.memory_space<vmem>>, vector<16x256xf32>
      %c0_13 = arith.constant 0 : index
      %c0_14 = arith.constant 0 : index
      %29 = vector.load %arg5[%c0_13, %c0_14] : memref<16x256xf32, #tpu.memory_space<vmem>>, vector<16x256xf32>
      tpu.vector_store %arg5[%c0_13, %c0_14], %28 {strides = array<i32>} : memref<16x256xf32, #tpu.memory_space<vmem>>, vector<16x256xf32>,
    } else {
    }
    %c0 = arith.constant 0 : index
    %c0_1 = arith.constant 0 : index
    %3 = vector.load %arg5[%c0, %c0_1] : memref<16x256xf32, #tpu.memory_space<vmem>>, vector<16x256xf32>
    %4 = arith.truncf %3 : vector<16x256xf32> to vector<16x256xbf16>
    %5 = arith.index_cast %arg1 : i32 to index
    %c0_2 = arith.constant 0 : index
    %c0_3 = arith.constant 0 : index
    %6 = vector.load %arg3[%5, %c0_2, %c0_3] : memref<3x256x512xbf16, #tpu.memory_space<vmem>>, vector<1x256x512xbf16>
    %7 = vector.shape_cast %6 : vector<1x256x512xbf16> to vector<256x512xbf16>
    %cst = arith.constant dense<0.000000e+00> : vector<16x512xf32>
    %8 = tpu.matmul %4, %7, %cst {dimension_numbers = #tpu.dot_dimension_numbers<[1], [0], [0], [1], [0, 0, 1, 1], [], []>} : vector<16x256xbf16>, vector<256x512xbf16>, vector<16x512xf32> -> vector<16x512xf32>
    %9 = arith.index_cast %arg1 : i32 to index
    %c0_4 = arith.constant 0 : index
    %c0_5 = arith.constant 0 : index
    %10 = vector.load %arg4[%9, %c0_4, %c0_5] : memref<3x1x512xf32, #tpu.memory_space<vmem>>, vector<1x1x512xf32>
    %11 = vector.shape_cast %10 : vector<1x1x512xf32> to vector<1x512xf32>
    %12 = vector.broadcast %11 : vector<1x512xf32> to vector<16x512xf32>
    %13 = arith.addf %8, %12 : vector<16x512xf32>
    %14 = vector.extract_strided_slice %13 {offsets = [0, 0], sizes = [16, 256], strides = [1, 1]} : vector<16x512xf32> to vector<16x256xf32>
    %15 = vector.extract_strided_slice %13 {offsets = [0, 256], sizes = [16, 256], strides = [1, 1]} : vector<16x512xf32> to vector<16x256xf32>
    %cst_6 = arith.constant 0.000000e+00 : f32
    %16 = vector.broadcast %cst_6 : f32 to vector<16x256xf32>
    %17 = arith.subf %16, %15 : vector<16x256xf32>
    %18 = math.exp %17 : vector<16x256xf32>
    %cst_7 = arith.constant 1.000000e+00 : f32
    %19 = vector.broadcast %cst_7 : f32 to vector<16x256xf32>
    %20 = arith.addf %19, %18 : vector<16x256xf32>
    %21 = tpu.reciprocal %20 {approx = true} : vector<16x256xf32> -> vector<16x256xf32>
    %cst_8 = arith.constant 0.000000e+00 : f32
    %22 = vector.broadcast %cst_8 : f32 to vector<16x256xf32>
    %23 = arith.maximumf %14, %22 : vector<16x256xf32>
    %24 = arith.subf %23, %3 : vector<16x256xf32>
    %25 = arith.mulf %21, %24 : vector<16x256xf32>
    %26 = arith.addf %3, %25 : vector<16x256xf32>
    %c0_9 = arith.constant 0 : index
    %c0_10 = arith.constant 0 : index
    %27 = vector.load %arg5[%c0_9, %c0_10] : memref<16x256xf32, #tpu.memory_space<vmem>>, vector<16x256xf32>
    tpu.vector_store %arg5[%c0_9, %c0_10], %26 {strides = array<i32>} : memref<16x256xf32, #tpu.memory_space<vmem>>, vector<16x256xf32>,
    return
  }
  func.func @transform_0(%arg0: i32, %arg1: i32) -> (i32, i32) {
    %c0_i32 = arith.constant 0 : i32
    %c0_i32_0 = arith.constant 0 : i32
    return %arg0, %c0_i32 : i32, i32
  }
  func.func @transform_1(%arg0: i32, %arg1: i32) -> (i32, i32, i32) {
    %c0_i32 = arith.constant 0 : i32
    %c0_i32_0 = arith.constant 0 : i32
    %c0_i32_1 = arith.constant 0 : i32
    %c0_i32_2 = arith.constant 0 : i32
    return %c0_i32, %c0_i32_0, %c0_i32_1 : i32, i32, i32
  }
  func.func @transform_2(%arg0: i32, %arg1: i32) -> (i32, i32, i32) {
    %c0_i32 = arith.constant 0 : i32
    %c0_i32_0 = arith.constant 0 : i32
    %c0_i32_1 = arith.constant 0 : i32
    %c0_i32_2 = arith.constant 0 : i32
    return %c0_i32, %c0_i32_0, %c0_i32_1 : i32, i32, i32
  }
  func.func @transform_3(%arg0: i32, %arg1: i32) -> (i32, i32) {
    %c0_i32 = arith.constant 0 : i32
    %c0_i32_0 = arith.constant 0 : i32
    return %arg0, %c0_i32 : i32, i32
  }
}

</mosaic_0001>

<llo_original>
// kernel: highway_forward.1
$region0: #{highway_forward.1}
  #allocation0 [shape = 'u32[]', space=smem, size = 0x4, offset = 0x4, fixed_abs, tag = 'smem constant byte address 0x4 - core index']
  #allocation1 [shape = 'u32[144,128]{1,0:T(1,128)}', space=vmem, size = 0x12000, scoped, tag = 'internal scratch']
  %s0 = inlined_call_operand.vmem [shape: f32[16,256], index: 0, kind: input, shape index: {}]
  %s1 = inlined_call_operand.hbm [shape: bf16[3,256,512], index: 1, kind: input, shape index: {}]
  %s2 = inlined_call_operand.vmem [shape: f32[3,1,512], index: 2, kind: input, shape index: {}]
  %s3 = inlined_call_operand.vmem [shape: f32[16,256], index: 3, kind: output, shape index: {}]
  %s4 = sld [smem:[#allocation0]]
  $region53: #{highway_forward.1} parent=0
    _
  %s6 = ssub.s32 1, %s4
  %s7 = scalar_select 0, %s6, %s4
  $region1: #{highway_forward.1} parent=0
    #allocation2 [shape = 'u8[786432]{0}', space=vmem, size = 0xc0000, scoped, tag = 'input window, operand 1, single buffered']
    #allocation3 [shape = 's32[2]{0}', space=sflag, size = 0x8, scoped, tag = 'scoped memory for highway_forward.1']
    %8 = vsyncpa [#allocation3], 0
    loop: start=0, step=1, limit=5
    $region2: #{highway_forward.1} parent=1 // loop_pre_header
      _
    $region3: #{highway_forward.1} parent=1 // loop_header
      %s10 = sphi 0, %s14
      %p11 = scmp.ge.s32.totalorder %s10, 5
      %s17 = sphi 0, %s29
      %s18 = sphi 0, %s25
      %s19 = sphi 0, %s17
      %s20 = sphi 0, %s18
      %s21 = sphi 0, %s19
      %s22 = sphi 0, %s20
      %s32 = sphi 0, %s34
      %s35 = sphi 0, %s32
      %s36 = sphi 0, %s35
      %s52 = sphi 0, %s36
      %s56 = sphi 0, %s56
      %s58 = sphi 0, %s56
      %s59 = sphi 0, %s58
      %s73 = sphi 0, %s59
      %s77 = sphi 0, %s77
      %s79 = sphi 0, %s77
      %s80 = sphi 0, %s79
      %s94 = sphi 0, %s80
      %s100 = sphi 0, %s102
      %s103 = sphi 0, %s100
      %s104 = sphi 0, %s103
      %s120 = sphi 0, %s104
    $region4: #{highway_forward.1} parent=1 // loop_header_branch
      %13 = sbr.rel (%p11) target = $region8
    $region5: #{highway_forward.1} parent=1 // loop_body
      %s15 = ssub.s32 %s10, 1
      %s16 = ssub.s32 %s10, 2
      %s23 = sadd.s32 1, %s18
      %p24 = scmp.ge.s32.totalorder %s23, 3
      %s25 = scalar_select %p24, 0, %s23
      %s26 = sadd.s32 1, %s17
      %s27 = scalar_select %p24, %s26, %s17
      %p28 = scmp.ge.s32.totalorder %s27, 1
      %s29 = scalar_select %p28, 0, %s27
      %s30 = ssub.s32 %s17, %s29
      %p31 = scmp.eq.s32.totalorder %s30, 0
      %s33 = sadd.s32 %s32, 1
      %s34 = scalar_select %p31, %s32, %s33
      %p37 = pneg %p31
      %p38 = scmp.eq.s32.totalorder %s10, 2
      %p39 = por %p37, %p38
      %p40 = scmp.ne.s32.totalorder %s32, %s35
      %p41 = scmp.eq.s32.totalorder %s10, 0
      %p42 = por %p40, %p41
      %p43 = scmp.ne.s32.totalorder %s32, %s35
      %p44 = scmp.eq.s32.totalorder %s15, 2
      %p45 = por %p43, %p44
      %p46 = scmp.ne.s32.totalorder %s35, %s36
      %p47 = scmp.eq.s32.totalorder %s15, 0
      %p48 = por %p46, %p47
      %p49 = scmp.ne.s32.totalorder %s35, %s36
      %p50 = scmp.eq.s32.totalorder %s16, 2
      %p51 = por %p49, %p50
      %p53 = scmp.ne.s32.totalorder %s36, %s52
      %p54 = scmp.eq.s32.totalorder %s16, 0
      %p55 = por %p53, %p54
      %s57 = sadd.s32 %s56, 1
      %p60 = scmp.eq.s32.totalorder %s10, 2
      %p61 = scmp.ne.s32.totalorder %s56, %s58
      %p62 = scmp.eq.s32.totalorder %s10, 0
      %p63 = por %p61, %p62
      %p64 = scmp.ne.s32.totalorder %s56, %s58
      %p65 = scmp.eq.s32.totalorder %s15, 2
      %p66 = por %p64, %p65
      %p67 = scmp.ne.s32.totalorder %s58, %s59
      %p68 = scmp.eq.s32.totalorder %s15, 0
      %p69 = por %p67, %p68
      %p70 = scmp.ne.s32.totalorder %s58, %s59
      %p71 = scmp.eq.s32.totalorder %s16, 2
      %p72 = por %p70, %p71
      %p74 = scmp.ne.s32.totalorder %s59, %s73
      %p75 = scmp.eq.s32.totalorder %s16, 0
      %p76 = por %p74, %p75
      %s78 = sadd.s32 %s77, 1
      %p81 = scmp.eq.s32.totalorder %s10, 2
      %p82 = scmp.ne.s32.totalorder %s77, %s79
      %p83 = scmp.eq.s32.totalorder %s10, 0
      %p84 = por %p82, %p83
      %p85 = scmp.ne.s32.totalorder %s77, %s79
      %p86 = scmp.eq.s32.totalorder %s15, 2
      %p87 = por %p85, %p86
      %p88 = scmp.ne.s32.totalorder %s79, %s80
      %p89 = scmp.eq.s32.totalorder %s15, 0
      %p90 = por %p88, %p89
      %p91 = scmp.ne.s32.totalorder %s79, %s80
      %p92 = scmp.eq.s32.totalorder %s16, 2
      %p93 = por %p91, %p92
      %p95 = scmp.ne.s32.totalorder %s80, %s94
      %p96 = scmp.eq.s32.totalorder %s16, 0
      %p97 = por %p95, %p96
      %s98 = ssub.s32 %s17, %s29
      %p99 = scmp.eq.s32.totalorder %s98, 0
      %s101 = sadd.s32 %s100, 1
      %s102 = scalar_select %p99, %s100, %s101
      %p105 = pneg %p99
      %p106 = scmp.eq.s32.totalorder %s10, 2
      %p107 = por %p105, %p106
      %p108 = scmp.ne.s32.totalorder %s100, %s103
      %p109 = scmp.eq.s32.totalorder %s10, 0
      %p110 = por %p108, %p109
      %p111 = scmp.ne.s32.totalorder %s100, %s103
      %p112 = scmp.eq.s32.totalorder %s15, 2
      %p113 = por %p111, %p112
      %p114 = scmp.ne.s32.totalorder %s103, %s104
      %p115 = scmp.eq.s32.totalorder %s15, 0
      %p116 = por %p114, %p115
      %p117 = scmp.ne.s32.totalorder %s103, %s104
      %p118 = scmp.eq.s32.totalorder %s16, 2
      %p119 = por %p117, %p118
      %p121 = scmp.ne.s32.totalorder %s104, %s120
      %p122 = scmp.eq.s32.totalorder %s16, 0
      %p123 = por %p121, %p122
      %p124 = scmp.le.s32.totalorder 1, %s10
      %p125 = scmp.lt.s32.totalorder %s10, 4
      %p126 = pnand %p124, %p125
      %p127 = pneg %p126
      // Predicated region
      $region9: #{highway_forward.1} parent=5 // pred_check
        _
      $region10: #{highway_forward.1} parent=5 // pred_check_branch
        %129 = sbr.rel (%p126) target = $region12
      $region11: #{highway_forward.1} parent=5 // pred_region
        %s130 = ssub.s32 %s10, 1
        // Predicated region
        $region13: #{highway_forward.1} parent=11 // pred_check
          %p131 = pneg %p48
        $region14: #{highway_forward.1} parent=11 // pred_check_branch
          %133 = sbr.rel (%p131) target = $region16
        $region15: #{highway_forward.1} parent=11 // pred_region
          %s134 = smul.u32 2, %s19
          %p135 = scmp.lt.s32.totalorder %s134, 1
          %s136 = scalar_select %p135, %s134, 1
          %s137 = smul.addr %s136, 2
          %s138 = smul.addr %s137, 8
          %s139 = scalar_lea.vmem %s0, %s138
          %s140 = smul.u32 2, %s19
        $region16: #{highway_forward.1} parent=11 // pred_fallthru
          _
        // Predicated region
        $region17: #{highway_forward.1} parent=11 // pred_check
          %p141 = pneg %p69
        $region18: #{highway_forward.1} parent=11 // pred_check_branch
          %143 = sbr.rel (%p141) target = $region20
        $region19: #{highway_forward.1} parent=11 // pred_region
          %s145 = ssub.s32 24576, 24576
          %146 = vsyncadd [#allocation3], %s145
          %s147 = sshll.u32 [#allocation2], 4
          %s148 = int_to_ptr.vmem [resolvable:$true] %s147
          %153 = dma.hbm_to_vmem [thread:$0]  %s1, 24576, %s148, [#allocation3], 256, 256, 16
        $region20: #{highway_forward.1} parent=11 // pred_fallthru
          _
        // Predicated region
        $region21: #{highway_forward.1} parent=11 // pred_check
          %p154 = pneg %p90
        $region22: #{highway_forward.1} parent=11 // pred_check_branch
          %156 = sbr.rel (%p154) target = $region24
        $region23: #{highway_forward.1} parent=11 // pred_region
          _
        $region24: #{highway_forward.1} parent=11 // pred_fallthru
          _
      $region12: #{highway_forward.1} parent=5 // pred_fallthru
        _
      %p157 = scmp.lt.s32.totalorder %s10, 3
      // Predicated region
      $region25: #{highway_forward.1} parent=5 // pred_check
        %p158 = pneg %p157
      $region26: #{highway_forward.1} parent=5 // pred_check_branch
        %160 = sbr.rel (%p158) target = $region28
      $region27: #{highway_forward.1} parent=5 // pred_region
        _
      $region28: #{highway_forward.1} parent=5 // pred_fallthru
        _
      %p161 = scmp.le.s32.totalorder 1, %s10
      %p162 = scmp.lt.s32.totalorder %s10, 4
      %p163 = pnand %p161, %p162
      %p164 = pneg %p163
      // Predicated region
      $region29: #{highway_forward.1} parent=5 // pred_check
        _
      $region30: #{highway_forward.1} parent=5 // pred_check_branch
        %166 = sbr.rel (%p163) target = $region32
      $region31: #{highway_forward.1} parent=5 // pred_region
        %s167 = ssub.s32 %s10, 1
        // Predicated region
        $region33: #{highway_forward.1} parent=31 // pred_check
          %p168 = pneg %p69
        $region34: #{highway_forward.1} parent=31 // pred_check_branch
          %170 = sbr.rel (%p168) target = $region36
        $region35: #{highway_forward.1} parent=31 // pred_region
          %171 = dma.done [#allocation3], 24576
        $region36: #{highway_forward.1} parent=31 // pred_fallthru
          _
        %s172 = smul.u32 2, %s19
        %p173 = scmp.lt.s32.totalorder %s172, 1
        %s174 = scalar_select %p173, %s172, 1
        %s175 = smul.addr %s174, 2
        %s176 = smul.addr %s175, 8
        %s177 = scalar_lea.vmem %s0, %s176
        %p178 = pneg %p48
        %p179 = pneg %p45
        %p180 = pneg %p69
        %p181 = pneg %p66
        %p182 = pneg %p90
        %p183 = pneg %p87
        %p184 = pneg %p116
        %p185 = pneg %p113
        %s186 = smul.u32 2, %s19
        %p187 = scmp.lt.s32.totalorder %s186, 1
        %s188 = scalar_select %p187, %s186, 1
        %s189 = smul.addr %s188, 2
        %s190 = smul.addr %s189, 8
        %s191 = scalar_lea.vmem %s3, %s190
        %s192 = smul.u32 2, %s19
        %p193 = scmp.lt.s32.totalorder %s192, 1
        %s194 = scalar_select %p193, %s192, 1
        %s195 = smul.addr %s194, 2
        %s196 = smul.addr %s195, 8
        %s197 = scalar_lea.vmem %s0, %s196
        %s198 = smul.u32 2, %s19
        %s199 = smul.u32 2, %s19
        %p200 = scmp.lt.s32.totalorder %s199, 1
        %s201 = scalar_select %p200, %s199, 1
        %s202 = smul.addr %s201, 2
        %s203 = smul.addr %s202, 8
        %s204 = scalar_lea.vmem %s3, %s203
        %s205 = smul.u32 2, %s19
        %p206 = scmp.eq.s32.totalorder %s20, 0
        // Predicated region
        $region37: #{highway_forward.1} parent=31 // pred_check
          %p207 = pneg %p206
        $region38: #{highway_forward.1} parent=31 // pred_check_branch
          %209 = sbr.rel (%p207) target = $region40
        $region39: #{highway_forward.1} parent=31 // pred_region
          %v210 = vld [vmem:[%s197] sm:$0xff]
          %v211 = vld [vmem:[%s197 + $0x8] sm:$0xff]
          %v212 = vld [vmem:[%s197 + $0x10] sm:$0xff]
          %v213 = vld [vmem:[%s197 + $0x18] sm:$0xff]
          %214 = vst [vmem:[%s204] sm:$0xff] %v210
          %215 = vst [vmem:[%s204 + $0x8] sm:$0xff] %v211
          %216 = vst [vmem:[%s204 + $0x10] sm:$0xff] %v212
          %217 = vst [vmem:[%s204 + $0x18] sm:$0xff] %v213
        $region40: #{highway_forward.1} parent=31 // pred_fallthru
          _
        %v218 = vld [vmem:[%s204] sm:$0xff]
        %v219 = vld [vmem:[%s204 + $0x8] sm:$0xff]
        %v220 = vld [vmem:[%s204 + $0x10] sm:$0xff]
        %v221 = vld [vmem:[%s204 + $0x18] sm:$0xff]
        %v222 = vpack.c.bf16 %v220, %v218
        %v223 = vpack.c.bf16 %v221, %v219
        %s224 = smul.u32 %s20, 128
        %s225 = smul.addr %s224, 4
        %s226 = scalar_lea.vmem [#allocation2], %s225
        %v227 = vld [vmem:[%s226] sm:$0xff]
        %v228 = vld [vmem:[%s226 + $0x8] sm:$0xff]
        %v229 = vld [vmem:[%s226 + $0x10] sm:$0xff]
        %v230 = vld [vmem:[%s226 + $0x18] sm:$0xff]
        %v231 = vld [vmem:[%s226 + $0x20] sm:$0xff]
        %v232 = vld [vmem:[%s226 + $0x28] sm:$0xff]
        %v233 = vld [vmem:[%s226 + $0x30] sm:$0xff]
        %v234 = vld [vmem:[%s226 + $0x38] sm:$0xff]
        %v235 = vld [vmem:[%s226 + $0x40] sm:$0xff]
        %v236 = vld [vmem:[%s226 + $0x48] sm:$0xff]
        %v237 = vld [vmem:[%s226 + $0x50] sm:$0xff]
        %v238 = vld [vmem:[%s226 + $0x58] sm:$0xff]
        %v239 = vld [vmem:[%s226 + $0x60] sm:$0xff]
        %v240 = vld [vmem:[%s226 + $0x68] sm:$0xff]
        %v241 = vld [vmem:[%s226 + $0x70] sm:$0xff]
        %v242 = vld [vmem:[%s226 + $0x78] sm:$0xff]
        %v243 = vld [vmem:[%s226 + $0x80] sm:$0xff]
        %v244 = vld [vmem:[%s226 + $0x88] sm:$0xff]
        %v245 = vld [vmem:[%s226 + $0x90] sm:$0xff]
        %v246 = vld [vmem:[%s226 + $0x98] sm:$0xff]
        %v247 = vld [vmem:[%s226 + $0xa0] sm:$0xff]
        %v248 = vld [vmem:[%s226 + $0xa8] sm:$0xff]
        %v249 = vld [vmem:[%s226 + $0xb0] sm:$0xff]
        %v250 = vld [vmem:[%s226 + $0xb8] sm:$0xff]
        %v251 = vld [vmem:[%s226 + $0xc0] sm:$0xff]
        %v252 = vld [vmem:[%s226 + $0xc8] sm:$0xff]
        %v253 = vld [vmem:[%s226 + $0xd0] sm:$0xff]
        %v254 = vld [vmem:[%s226 + $0xd8] sm:$0xff]
        %v255 = vld [vmem:[%s226 + $0xe0] sm:$0xff]
        %v256 = vld [vmem:[%s226 + $0xe8] sm:$0xff]
        %v257 = vld [vmem:[%s226 + $0xf0] sm:$0xff]
        %v258 = vld [vmem:[%s226 + $0xf8] sm:$0xff]
        %v259 = vld [vmem:[%s226 + $0x100] sm:$0xff]
        %v260 = vld [vmem:[%s226 + $0x108] sm:$0xff]
        %v261 = vld [vmem:[%s226 + $0x110] sm:$0xff]
        %v262 = vld [vmem:[%s226 + $0x118] sm:$0xff]
        %v263 = vld [vmem:[%s226 + $0x120] sm:$0xff]
        %v264 = vld [vmem:[%s226 + $0x128] sm:$0xff]
        %v265 = vld [vmem:[%s226 + $0x130] sm:$0xff]
        %v266 = vld [vmem:[%s226 + $0x138] sm:$0xff]
        %v267 = vld [vmem:[%s226 + $0x140] sm:$0xff]
        %v268 = vld [vmem:[%s226 + $0x148] sm:$0xff]
        %v269 = vld [vmem:[%s226 + $0x150] sm:$0xff]
        %v270 = vld [vmem:[%s226 + $0x158] sm:$0xff]
        %v271 = vld [vmem:[%s226 + $0x160] sm:$0xff]
        %v272 = vld [vmem:[%s226 + $0x168] sm:$0xff]
        %v273 = vld [vmem:[%s226 + $0x170] sm:$0xff]
        %v274 = vld [vmem:[%s226 + $0x178] sm:$0xff]
        %v275 = vld [vmem:[%s226 + $0x180] sm:$0xff]
        %v276 = vld [vmem:[%s226 + $0x188] sm:$0xff]
        %v277 = vld [vmem:[%s226 + $0x190] sm:$0xff]
        %v278 = vld [vmem:[%s226 + $0x198] sm:$0xff]
        %v279 = vld [vmem:[%s226 + $0x1a0] sm:$0xff]
        %v280 = vld [vmem:[%s226 + $0x1a8] sm:$0xff]
        %v281 = vld [vmem:[%s226 + $0x1b0] sm:$0xff]
        %v282 = vld [vmem:[%s226 + $0x1b8] sm:$0xff]
        %v283 = vld [vmem:[%s226 + $0x1c0] sm:$0xff]
        %v284 = vld [vmem:[%s226 + $0x1c8] sm:$0xff]
        %v285 = vld [vmem:[%s226 + $0x1d0] sm:$0xff]
        %v286 = vld [vmem:[%s226 + $0x1d8] sm:$0xff]
        %v287 = vld [vmem:[%s226 + $0x1e0] sm:$0xff]
        %v288 = vld [vmem:[%s226 + $0x1e8] sm:$0xff]
        %v289 = vld [vmem:[%s226 + $0x1f0] sm:$0xff]
        %v290 = vld [vmem:[%s226 + $0x1f8] sm:$0xff]
        %s291 = smul.u32 %s20, 4
        %s292 = scalar_lea.vmem %s2, %s291
        %v293 = vld [vmem:[%s292] sm:$0xf]
        %v295 = vlaneseq
        %v296 = vshrl.u32 %v295, 7
        %v297 = vsub.s32 0, %v296
        %v298 = vrot.slane %v293, %v297
        %v299 = vlaneseq
        %v300 = vshrl.u32 %v299, 7
        %v301 = vsub.s32 1, %v300
        %v302 = vrot.slane %v293, %v301
        %v303 = vlaneseq
        %v304 = vshrl.u32 %v303, 7
        %v305 = vsub.s32 2, %v304
        %v306 = vrot.slane %v293, %v305
        %v307 = vlaneseq
        %v308 = vshrl.u32 %v307, 7
        %v309 = vsub.s32 3, %v308
        %v310 = vrot.slane %v293, %v309
        %v379 = vunpack.c.l.b16 %v227
        %v380 = vunpack.c.h.b16 %v227
        %v381 = vunpack.c.l.b16 %v228
        %v382 = vunpack.c.h.b16 %v228
        %v383 = vunpack.c.l.b16 %v229
        %v384 = vunpack.c.h.b16 %v229
        %v385 = vunpack.c.l.b16 %v230
        %v386 = vunpack.c.h.b16 %v230
        %v387 = vunpack.c.l.b16 %v231
        %v388 = vunpack.c.h.b16 %v231
        %v389 = vunpack.c.l.b16 %v232
        %v390 = vunpack.c.h.b16 %v232
        %v391 = vunpack.c.l.b16 %v233
        %v392 = vunpack.c.h.b16 %v233
        %v393 = vunpack.c.l.b16 %v234
        %v394 = vunpack.c.h.b16 %v234
        %v395 = vunpack.c.l.b16 %v235
        %v396 = vunpack.c.h.b16 %v235
        %v397 = vunpack.c.l.b16 %v236
        %v398 = vunpack.c.h.b16 %v236
        %v399 = vunpack.c.l.b16 %v237
        %v400 = vunpack.c.h.b16 %v237
        %v401 = vunpack.c.l.b16 %v238
        %v402 = vunpack.c.h.b16 %v238
        %v403 = vunpack.c.l.b16 %v239
        %v404 = vunpack.c.h.b16 %v239
        %v405 = vunpack.c.l.b16 %v240
        %v406 = vunpack.c.h.b16 %v240
        %v407 = vunpack.c.l.b16 %v241
        %v408 = vunpack.c.h.b16 %v241
        %v409 = vunpack.c.l.b16 %v242
        %v410 = vunpack.c.h.b16 %v242
        %v411 = vunpack.c.l.b16 %v243
        %v412 = vunpack.c.h.b16 %v243
        %v413 = vunpack.c.l.b16 %v244
        %v414 = vunpack.c.h.b16 %v244
        %v415 = vunpack.c.l.b16 %v245
        %v416 = vunpack.c.h.b16 %v245
        %v417 = vunpack.c.l.b16 %v246
        %v418 = vunpack.c.h.b16 %v246
        %v419 = vunpack.c.l.b16 %v247
        %v420 = vunpack.c.h.b16 %v247
        %v421 = vunpack.c.l.b16 %v248
        %v422 = vunpack.c.h.b16 %v248
        %v423 = vunpack.c.l.b16 %v249
        %v424 = vunpack.c.h.b16 %v249
        %v425 = vunpack.c.l.b16 %v250
        %v426 = vunpack.c.h.b16 %v250
        %v427 = vunpack.c.l.b16 %v251
        %v428 = vunpack.c.h.b16 %v251
        %v429 = vunpack.c.l.b16 %v252
        %v430 = vunpack.c.h.b16 %v252
        %v431 = vunpack.c.l.b16 %v253
        %v432 = vunpack.c.h.b16 %v253
        %v433 = vunpack.c.l.b16 %v254
        %v434 = vunpack.c.h.b16 %v254
        %v435 = vunpack.c.l.b16 %v255
        %v436 = vunpack.c.h.b16 %v255
        %v437 = vunpack.c.l.b16 %v256
        %v438 = vunpack.c.h.b16 %v256
        %v439 = vunpack.c.l.b16 %v257
        %v440 = vunpack.c.h.b16 %v257
        %v441 = vunpack.c.l.b16 %v258
        %v442 = vunpack.c.h.b16 %v258
        %v443 = vunpack.c.l.b16 %v259
        %v444 = vunpack.c.h.b16 %v259
        %v445 = vunpack.c.l.b16 %v260
        %v446 = vunpack.c.h.b16 %v260
        %v447 = vunpack.c.l.b16 %v261
        %v448 = vunpack.c.h.b16 %v261
        %v449 = vunpack.c.l.b16 %v262
        %v450 = vunpack.c.h.b16 %v262
        %v451 = vunpack.c.l.b16 %v263
        %v452 = vunpack.c.h.b16 %v263
        %v453 = vunpack.c.l.b16 %v264
        %v454 = vunpack.c.h.b16 %v264
        %v455 = vunpack.c.l.b16 %v265
        %v456 = vunpack.c.h.b16 %v265
        %v457 = vunpack.c.l.b16 %v266
        %v458 = vunpack.c.h.b16 %v266
        %v459 = vunpack.c.l.b16 %v267
        %v460 = vunpack.c.h.b16 %v267
        %v461 = vunpack.c.l.b16 %v268
        %v462 = vunpack.c.h.b16 %v268
        %v463 = vunpack.c.l.b16 %v269
        %v464 = vunpack.c.h.b16 %v269
        %v465 = vunpack.c.l.b16 %v270
        %v466 = vunpack.c.h.b16 %v270
        %v467 = vunpack.c.l.b16 %v271
        %v468 = vunpack.c.h.b16 %v271
        %v469 = vunpack.c.l.b16 %v272
        %v470 = vunpack.c.h.b16 %v272
        %v471 = vunpack.c.l.b16 %v273
        %v472 = vunpack.c.h.b16 %v273
        %v473 = vunpack.c.l.b16 %v274
        %v474 = vunpack.c.h.b16 %v274
        %v475 = vunpack.c.l.b16 %v275
        %v476 = vunpack.c.h.b16 %v275
        %v477 = vunpack.c.l.b16 %v276
        %v478 = vunpack.c.h.b16 %v276
        %v479 = vunpack.c.l.b16 %v277
        %v480 = vunpack.c.h.b16 %v277
        %v481 = vunpack.c.l.b16 %v278
        %v482 = vunpack.c.h.b16 %v278
        %v483 = vunpack.c.l.b16 %v279
        %v484 = vunpack.c.h.b16 %v279
        %v485 = vunpack.c.l.b16 %v280
        %v486 = vunpack.c.h.b16 %v280
        %v487 = vunpack.c.l.b16 %v281
        %v488 = vunpack.c.h.b16 %v281
        %v489 = vunpack.c.l.b16 %v282
        %v490 = vunpack.c.h.b16 %v282
        %v491 = vunpack.c.l.b16 %v283
        %v492 = vunpack.c.h.b16 %v283
        %v493 = vunpack.c.l.b16 %v284
        %v494 = vunpack.c.h.b16 %v284
        %v495 = vunpack.c.l.b16 %v285
        %v496 = vunpack.c.h.b16 %v285
        %v497 = vunpack.c.l.b16 %v286
        %v498 = vunpack.c.h.b16 %v286
        %v499 = vunpack.c.l.b16 %v287
        %v500 = vunpack.c.h.b16 %v287
        %v501 = vunpack.c.l.b16 %v288
        %v502 = vunpack.c.h.b16 %v288
        %v503 = vunpack.c.l.b16 %v289
        %v504 = vunpack.c.h.b16 %v289
        %v505 = vunpack.c.l.b16 %v290
        %v506 = vunpack.c.h.b16 %v290
        %v507 = vpack.c.b16 %v383, %v379
        %v508 = vpack.c.b16 %v384, %v380
        %v509 = vpack.c.b16 %v385, %v381
        %v510 = vpack.c.b16 %v386, %v382
        %v511 = vpack.c.b16 %v391, %v387
        %v512 = vpack.c.b16 %v392, %v388
        %v513 = vpack.c.b16 %v393, %v389
        %v514 = vpack.c.b16 %v394, %v390
        %v515 = vpack.c.b16 %v399, %v395
        %v516 = vpack.c.b16 %v400, %v396
        %v517 = vpack.c.b16 %v401, %v397
        %v518 = vpack.c.b16 %v402, %v398
        %v519 = vpack.c.b16 %v407, %v403
        %v520 = vpack.c.b16 %v408, %v404
        %v521 = vpack.c.b16 %v409, %v405
        %v522 = vpack.c.b16 %v410, %v406
        %v523 = vpack.c.b16 %v415, %v411
        %v524 = vpack.c.b16 %v416, %v412
        %v525 = vpack.c.b16 %v417, %v413
        %v526 = vpack.c.b16 %v418, %v414
        %v527 = vpack.c.b16 %v423, %v419
        %v528 = vpack.c.b16 %v424, %v420
        %v529 = vpack.c.b16 %v425, %v421
        %v530 = vpack.c.b16 %v426, %v422
        %v531 = vpack.c.b16 %v431, %v427
        %v532 = vpack.c.b16 %v432, %v428
        %v533 = vpack.c.b16 %v433, %v429
        %v534 = vpack.c.b16 %v434, %v430
        %v535 = vpack.c.b16 %v439, %v435
        %v536 = vpack.c.b16 %v440, %v436
        %v537 = vpack.c.b16 %v441, %v437
        %v538 = vpack.c.b16 %v442, %v438
        %v539 = vpack.c.b16 %v447, %v443
        %v540 = vpack.c.b16 %v448, %v444
        %v541 = vpack.c.b16 %v449, %v445
        %v542 = vpack.c.b16 %v450, %v446
        %v543 = vpack.c.b16 %v455, %v451
        %v544 = vpack.c.b16 %v456, %v452
        %v545 = vpack.c.b16 %v457, %v453
        %v546 = vpack.c.b16 %v458, %v454
        %v547 = vpack.c.b16 %v463, %v459
        %v548 = vpack.c.b16 %v464, %v460
        %v549 = vpack.c.b16 %v465, %v461
        %v550 = vpack.c.b16 %v466, %v462
        %v551 = vpack.c.b16 %v471, %v467
        %v552 = vpack.c.b16 %v472, %v468
        %v553 = vpack.c.b16 %v473, %v469
        %v554 = vpack.c.b16 %v474, %v470
        %v555 = vpack.c.b16 %v479, %v475
        %v556 = vpack.c.b16 %v480, %v476
        %v557 = vpack.c.b16 %v481, %v477
        %v558 = vpack.c.b16 %v482, %v478
        %v559 = vpack.c.b16 %v487, %v483
        %v560 = vpack.c.b16 %v488, %v484
        %v561 = vpack.c.b16 %v489, %v485
        %v562 = vpack.c.b16 %v490, %v486
        %v563 = vpack.c.b16 %v495, %v491
        %v564 = vpack.c.b16 %v496, %v492
        %v565 = vpack.c.b16 %v497, %v493
        %v566 = vpack.c.b16 %v498, %v494
        %v567 = vpack.c.b16 %v503, %v499
        %v568 = vpack.c.b16 %v504, %v500
        %v569 = vpack.c.b16 %v505, %v501
        %v570 = vpack.c.b16 %v506, %v502
        %635 = vmatprep.subr.bf16.mxu0 %v508
        %636 = vmatpush1.bf16.msra.mxu0 %v507
        %637 = vmatprep.subr.bf16.mxu0 %v512
        %638 = vmatpush1.bf16.msra.mxu0 %v511
        %639 = vmatprep.subr.bf16.mxu0 %v516
        %640 = vmatpush1.bf16.msra.mxu0 %v515
        %641 = vmatprep.subr.bf16.mxu0 %v520
        %642 = vmatpush1.bf16.msra.mxu0 %v519
        %643 = vmatprep.subr.bf16.mxu0 %v524
        %644 = vmatpush1.bf16.msra.mxu0 %v523
        %645 = vmatprep.subr.bf16.mxu0 %v528
        %646 = vmatpush1.bf16.msra.mxu0 %v527
        %647 = vmatprep.subr.bf16.mxu0 %v532
        %648 = vmatpush1.bf16.msra.mxu0 %v531
        %649 = vmatprep.subr.bf16.mxu0 %v536
        %650 = vmatpush1.bf16.msra.mxu0 %v535
        %651 = vmatprep.subr.bf16.mxu0 %v540
        %652 = vmatpush1.bf16.msra.mxu0 %v539
        %653 = vmatprep.subr.bf16.mxu0 %v544
        %654 = vmatpush1.bf16.msra.mxu0 %v543
        %655 = vmatprep.subr.bf16.mxu0 %v548
        %656 = vmatpush1.bf16.msra.mxu0 %v547
        %657 = vmatprep.subr.bf16.mxu0 %v552
        %658 = vmatpush1.bf16.msra.mxu0 %v551
        %659 = vmatprep.subr.bf16.mxu0 %v556
        %660 = vmatpush1.bf16.msra.mxu0 %v555
        %661 = vmatprep.subr.bf16.mxu0 %v560
        %662 = vmatpush1.bf16.msra.mxu0 %v559
        %663 = vmatprep.subr.bf16.mxu0 %v564
        %664 = vmatpush1.bf16.msra.mxu0 %v563
        %665 = vmatprep.subr.bf16.mxu0 %v568
        %666 = vmatpush1.bf16.msra.mxu0 %v567
        %667 = vmatprep.mubr.bf16.mxu0 %v223
        %668 = vmatmul.mubr.bf16.gmra.mrb[0].mxu0 %v222
        %v669 = vpop.f32.mrb[0].mxu0
        %v670 = vadd.f32 %v298, %v669
        %v671 = vpop.f32.mrb[0].mxu0
        %v672 = vadd.f32 %v302, %v671
        %v673 = vpop.f32.mrb[0].mxu0
        %v674 = vadd.f32 %v298, %v673
        %v675 = vpop.f32.mrb[0].mxu0
        %v676 = vadd.f32 %v302, %v675
        %677 = vdwg.mxu0
        %678 = vmatprep.subr.bf16.mxu0 %v510
        %679 = vmatpush1.bf16.msra.mxu0 %v509
        %680 = vmatprep.subr.bf16.mxu0 %v514
        %681 = vmatpush1.bf16.msra.mxu0 %v513
        %682 = vmatprep.subr.bf16.mxu0 %v518
        %683 = vmatpush1.bf16.msra.mxu0 %v517
        %684 = vmatprep.subr.bf16.mxu0 %v522
        %685 = vmatpush1.bf16.msra.mxu0 %v521
        %686 = vmatprep.subr.bf16.mxu0 %v526
        %687 = vmatpush1.bf16.msra.mxu0 %v525
        %688 = vmatprep.subr.bf16.mxu0 %v530
        %689 = vmatpush1.bf16.msra.mxu0 %v529
        %690 = vmatprep.subr.bf16.mxu0 %v534
        %691 = vmatpush1.bf16.msra.mxu0 %v533
        %692 = vmatprep.subr.bf16.mxu0 %v538
        %693 = vmatpush1.bf16.msra.mxu0 %v537
        %694 = vmatprep.subr.bf16.mxu0 %v542
        %695 = vmatpush1.bf16.msra.mxu0 %v541
        %696 = vmatprep.subr.bf16.mxu0 %v546
        %697 = vmatpush1.bf16.msra.mxu0 %v545
        %698 = vmatprep.subr.bf16.mxu0 %v550
        %699 = vmatpush1.bf16.msra.mxu0 %v549
        %700 = vmatprep.subr.bf16.mxu0 %v554
        %701 = vmatpush1.bf16.msra.mxu0 %v553
        %702 = vmatprep.subr.bf16.mxu0 %v558
        %703 = vmatpush1.bf16.msra.mxu0 %v557
        %704 = vmatprep.subr.bf16.mxu0 %v562
        %705 = vmatpush1.bf16.msra.mxu0 %v561
        %706 = vmatprep.subr.bf16.mxu0 %v566
        %707 = vmatpush1.bf16.msra.mxu0 %v565
        %708 = vmatprep.subr.bf16.mxu0 %v570
        %709 = vmatpush1.bf16.msra.mxu0 %v569
        %710 = vmatprep.mubr.bf16.mxu0 %v223
        %711 = vmatmul.mubr.bf16.gmra.mrb[0].mxu0 %v222
        %v712 = vpop.f32.mrb[0].mxu0
        %v713 = vadd.f32 %v306, %v712
        %v714 = vpop.f32.mrb[0].mxu0
        %v715 = vadd.f32 %v310, %v714
        %v716 = vpop.f32.mrb[0].mxu0
        %v717 = vadd.f32 %v306, %v716
        %v718 = vpop.f32.mrb[0].mxu0
        %v719 = vadd.f32 %v310, %v718
        %720 = vdwg.mxu0
        %v721 = vsub.f32 0.0, %v713
        %v722 = vsub.f32 0.0, %v715
        %v723 = vsub.f32 0.0, %v717
        %v724 = vsub.f32 0.0, %v719
        %v725 = vmul.f32 %v721, 1.442695
        %v726 = vpow.pop %v725
        %v727 = vmul.f32 %v722, 1.442695
        %v728 = vpow.pop %v727
        %v729 = vmul.f32 %v723, 1.442695
        %v730 = vpow.pop %v729
        %v731 = vmul.f32 %v724, 1.442695
        %v732 = vpow.pop %v731
        %v733 = vadd.f32 %v726, 1.0
        %v734 = vadd.f32 %v728, 1.0
        %v735 = vadd.f32 %v730, 1.0
        %v736 = vadd.f32 %v732, 1.0
        %v737 = vrcp.pop %v733
        %v738 = vrcp.pop %v734
        %v739 = vrcp.pop %v735
        %v740 = vrcp.pop %v736
        %v741 = vmax.f32 %v670, 0.0
        %v742 = vmax.f32 %v672, 0.0
        %v743 = vmax.f32 %v674, 0.0
        %v744 = vmax.f32 %v676, 0.0
        %v745 = vsub.f32 %v741, %v218
        %v746 = vsub.f32 %v742, %v219
        %v747 = vsub.f32 %v743, %v220
        %v748 = vsub.f32 %v744, %v221
        %v749 = vmul.f32 %v737, %v745
        %v750 = vmul.f32 %v738, %v746
        %v751 = vmul.f32 %v739, %v747
        %v752 = vmul.f32 %v740, %v748
        %v753 = vadd.f32 %v218, %v749
        %v754 = vadd.f32 %v219, %v750
        %v755 = vadd.f32 %v220, %v751
        %v756 = vadd.f32 %v221, %v752
        %757 = vst [vmem:[%s204] sm:$0xff] %v753
        %758 = vst [vmem:[%s204 + $0x8] sm:$0xff] %v754
        %759 = vst [vmem:[%s204 + $0x10] sm:$0xff] %v755
        %760 = vst [vmem:[%s204 + $0x18] sm:$0xff] %v756
        %s761 = smul.u32 2, %s19
        %p762 = scmp.lt.s32.totalorder %s761, 1
        %s763 = scalar_select %p762, %s761, 1
        %s764 = smul.addr %s763, 2
        %s765 = smul.addr %s764, 8
        %s766 = scalar_lea.vmem %s3, %s765
        // Predicated region
        $region41: #{highway_forward.1} parent=31 // pred_check
          %p767 = pneg %p113
        $region42: #{highway_forward.1} parent=31 // pred_check_branch
          %769 = sbr.rel (%p767) target = $region44
        $region43: #{highway_forward.1} parent=31 // pred_region
          %s770 = smul.u32 2, %s19
        $region44: #{highway_forward.1} parent=31 // pred_fallthru
          _
        // Predicated region
        $region45: #{highway_forward.1} parent=31 // pred_check
          %p771 = pneg %p113
        $region46: #{highway_forward.1} parent=31 // pred_check_branch
          %773 = sbr.rel (%p771) target = $region48
        $region47: #{highway_forward.1} parent=31 // pred_region
          %s774 = smul.u32 2, %s19
          %p775 = scmp.lt.s32.totalorder %s774, 1
          %s776 = scalar_select %p775, %s774, 1
          %s777 = smul.addr %s776, 2
          %s778 = smul.addr %s777, 8
          %s779 = scalar_lea.vmem %s3, %s778
        $region48: #{highway_forward.1} parent=31 // pred_fallthru
          _
      $region32: #{highway_forward.1} parent=5 // pred_fallthru
        _
      %p780 = scmp.le.s32.totalorder 2, %s10
      // Predicated region
      $region49: #{highway_forward.1} parent=5 // pred_check
        %p781 = pneg %p780
      $region50: #{highway_forward.1} parent=5 // pred_check_branch
        %783 = sbr.rel (%p781) target = $region52
      $region51: #{highway_forward.1} parent=5 // pred_region
        %s784 = ssub.s32 %s10, 2
      $region52: #{highway_forward.1} parent=5 // pred_fallthru
        _
    $region6: #{highway_forward.1} parent=1 // loop_footer
      %s14 = sadd.s32 1, %s10
    $region7: #{highway_forward.1} parent=1 // loop_footer_branch
      %9 = sbr.rel target = $region3
    $region8: #{highway_forward.1} parent=1 // loop_exit
      _
    %785 = vsyncpa [#allocation3], 1
    %s786 = scalar_lea.sflag [#allocation3], 1
    %787 = vsyncpa %s786, 1

</llo_original>
